<compile_context>
chip_gen: v7x
topology: tpu7x:2x2x1
jax: 0.10.0
libtpu: 0.0.40
codegen_flags: <defaults>
</compile_context>

<pallas_src>
import jax
import jax.numpy as jnp
from jax.experimental import pallas as pl
from jax.experimental.pallas import tpu as pltpu

_LANES = 1024                          # lane-dense last dim (multiple of 128)
_MAX_TILE_BYTES = 8 * 1024 * 1024      # ~8 MiB per tile
_VMEM_LIMIT_BYTES = 48 * 1024 * 1024   # covers 2 arrays x 2 buffers x 8 MiB + headroom


def _round_up(n, m):
    return -(-n // m) * m


def _h_swish_kernel(x_ref, o_ref):
    x = x_ref[...]
    # x * relu6(x + 3) / 6  (multiply by the constant reciprocal; VPU-only)
    o_ref[...] = x * (jnp.clip(x + 3.0, 0.0, 6.0) * (1.0 / 6.0))


def h_swish(x, *, lanes=_LANES):
    """Pallas implementation of the PyTorch h_swish module's forward pass."""
    orig_shape = x.shape
    total = x.size
    if total == 0:                      # zero-size guard (avoids div-by-zero)
        return x

    itemsize = jnp.dtype(x.dtype).itemsize
    row_align = 8 * max(1, 4 // itemsize)          # f32: 8, bf16: 16, int8: 32
    max_tile_rows = max(row_align, _MAX_TILE_BYTES // (lanes * itemsize))

    flat = x.reshape(-1)
    pad = _round_up(total, lanes) - total
    if pad:
        # Rare slow path: only needed when total is not a multiple of `lanes`
        # (the reshape below requires it).  Pads < `lanes` elements.
        flat = jnp.pad(flat, (0, pad))
    rows = flat.size // lanes

    # Tile-row choice:
    #   * tiny inputs: one block equal to the full array (always legal),
    #   * otherwise: split into >= 2 row-tiles (v7x dual-TC sharding via the
    #     "parallel" grid axis), capped at ~8 MiB per tile.
    # grid = cdiv(rows, tile_rows): Pallas edge-block masking handles the last
    # partial tile; out-of-bounds lanes are computed but never written back.
    if rows <= row_align:
        tile_rows = rows
    else:
        tile_rows = min(max_tile_rows, _round_up(pl.cdiv(rows, 2), row_align))
    grid = pl.cdiv(rows, tile_rows)

    x2 = flat.reshape(rows, lanes)
    out2 = pl.pallas_call(
        _h_swish_kernel,
        out_shape=jax.ShapeDtypeStruct((rows, lanes), x.dtype),
        grid=(grid,),
        in_specs=[pl.BlockSpec((tile_rows, lanes), lambda i: (i, 0))],
        out_specs=pl.BlockSpec((tile_rows, lanes), lambda i: (i, 0)),
        compiler_params=pltpu.CompilerParams(
            dimension_semantics=("parallel",),
            vmem_limit_bytes=_VMEM_LIMIT_BYTES),
    )(x2)

    out = out2.reshape(-1)
    if pad:                             # fast path emits no slice op
        out = out[:total]
    return out.reshape(orig_shape)


def _reference_f32(x):
    """Pure-JAX reference in f32: x * ReLU6(x + 3) / 6."""
    xf = x.astype(jnp.float32)
    return xf * (jnp.clip(xf + 3.0, 0.0, 6.0) * (1.0 / 6.0))


if __name__ == "__main__":
    key = jax.random.PRNGKey(0)
    k1, k2, k3, k4 = jax.random.split(key, 4)

    # 1) Small NCHW tensor (matches the module's typical 4-D activation input).
    #    2048 elements -> fast path, no pad/slice, grid=1.
    x_small = 4.0 * jax.random.normal(k1, (2, 4, 16, 16), jnp.float32)
    out_small = jax.block_until_ready(h_swish(x_small))
    assert out_small.shape == x_small.shape and out_small.dtype == x_small.dtype
    assert jnp.allclose(out_small, _reference_f32(x_small), rtol=1e-6, atol=1e-6)

    # 2) Medium NCHW tensor: rows=98, tile_rows=56 -> grid=2 with a partial
    #    edge block (exercises the non-divisible grid path, no padding).
    x_med = 4.0 * jax.random.normal(k2, (4, 8, 56, 56), jnp.float32)
    out_med = jax.block_until_ready(h_swish(x_med))
    assert out_med.shape == x_med.shape
    assert jnp.allclose(out_med, _reference_f32(x_med), rtol=1e-6, atol=1e-6)

    # 3) Ragged 1-D input (not a multiple of 1024) -> exercises the pad path.
    x_rag = 4.0 * jax.random.normal(k3, (1000,), jnp.float32)
    out_rag = jax.block_until_ready(h_swish(x_rag))
    assert out_rag.shape == x_rag.shape
    assert jnp.allclose(out_rag, _reference_f32(x_rag), rtol=1e-6, atol=1e-6)

    # 4) bf16 input -> exercises the dtype-scaled row alignment / tile sizing.
    x_bf = (4.0 * jax.random.normal(k4, (2, 16, 32, 32), jnp.float32)
            ).astype(jnp.bfloat16)
    out_bf = jax.block_until_ready(h_swish(x_bf))
    assert out_bf.shape == x_bf.shape and out_bf.dtype == jnp.bfloat16
    assert jnp.allclose(out_bf.astype(jnp.float32), _reference_f32(x_bf),
                        rtol=5e-2, atol=1e-1)

    print("KERNEL_OK")
</pallas_src>

<mosaic_0001>
module attributes {stable_mosaic.version = 11 : i64} {
  func.func @_h_swish_kernel(%arg0: i32, %arg1: memref<2x1024xf32, #tpu.memory_space<vmem>>, %arg2: memref<2x1024xf32, #tpu.memory_space<vmem>>) attributes {dimension_semantics = [#tpu.dimension_semantics<parallel>], iteration_bounds = array<i64: 1>, scalar_prefetch = 0 : i64, scratch_operands = 0 : i64, tpu.core_type = #tpu.core_type<tc>, window_params = [{transform_indices = @transform_0, window_bounds = array<i64: 2, 1024>}, {transform_indices = @transform_1, window_bounds = array<i64: 2, 1024>}]} {
    %c0 = arith.constant 0 : index
    %c0_0 = arith.constant 0 : index
    %0 = vector.load %arg1[%c0, %c0_0] : memref<2x1024xf32, #tpu.memory_space<vmem>>, vector<2x1024xf32>
    %cst = arith.constant 3.000000e+00 : f32
    %1 = vector.broadcast %cst : f32 to vector<2x1024xf32>
    %2 = arith.addf %0, %1 : vector<2x1024xf32>
    %cst_1 = arith.constant 0.000000e+00 : f32
    %cst_2 = arith.constant 6.000000e+00 : f32
    %3 = vector.broadcast %cst_1 : f32 to vector<2x1024xf32>
    %4 = arith.maximumf %3, %2 : vector<2x1024xf32>
    %5 = vector.broadcast %cst_2 : f32 to vector<2x1024xf32>
    %6 = arith.minimumf %5, %4 : vector<2x1024xf32>
    %cst_3 = arith.constant 0.166666672 : f32
    %7 = vector.broadcast %cst_3 : f32 to vector<2x1024xf32>
    %8 = arith.mulf %6, %7 : vector<2x1024xf32>
    %9 = arith.mulf %0, %8 : vector<2x1024xf32>
    %c0_4 = arith.constant 0 : index
    %c0_5 = arith.constant 0 : index
    %10 = vector.load %arg2[%c0_4, %c0_5] : memref<2x1024xf32, #tpu.memory_space<vmem>>, vector<2x1024xf32>
    tpu.vector_store %arg2[%c0_4, %c0_5], %9 {strides = array<i32>} : memref<2x1024xf32, #tpu.memory_space<vmem>>, vector<2x1024xf32>,
    return
  }
  func.func @transform_0(%arg0: i32) -> (i32, i32) {
    %c0_i32 = arith.constant 0 : i32
    %c0_i32_0 = arith.constant 0 : i32
    return %arg0, %c0_i32 : i32, i32
  }
  func.func @transform_1(%arg0: i32) -> (i32, i32) {
    %c0_i32 = arith.constant 0 : i32
    %c0_i32_0 = arith.constant 0 : i32
    return %arg0, %c0_i32 : i32, i32
  }
}

</mosaic_0001>

<llo_original>
// kernel: tpu_custom_call.1
$region0: #{tpu_custom_call.1}
  #allocation0 [shape = 'u32[]', space=smem, size = 0x4, offset = 0x4, fixed_abs, tag = 'smem constant byte address 0x4 - core index']
  #allocation1 [shape = 'u32[144,128]{1,0:T(1,128)}', space=vmem, size = 0x12000, scoped, tag = 'internal scratch']
  %s0 = inlined_call_operand.hbm [shape: f32[2,1024], index: 0, kind: input, shape index: {}]
  %s1 = inlined_call_operand.hbm [shape: f32[2,1024], index: 1, kind: output, shape index: {}]
  %s2 = sld [smem:[#allocation0]]
  $region18: #{tpu_custom_call.1} parent=0
    _
  %s4 = ssub.s32 1, %s2
  %s5 = scalar_select 0, %s4, %s2
  $region1: #{tpu_custom_call.1} parent=0
    #allocation2 [shape = 'u8[8192]{0}', space=vmem, size = 0x2000, scoped, tag = 'input window, operand 0, single buffered']
    #allocation3 [shape = 's32[1]{0}', space=sflag, size = 0x4, scoped, tag = 'scoped memory for tpu_custom_call.1']
    #allocation4 [shape = 's32[1]{0}', space=sflag, size = 0x4, scoped, tag = 'scoped memory for tpu_custom_call.1']
    #allocation5 [shape = 'u8[8192]{0}', space=vmem, size = 0x2000, scoped, tag = 'output window, operand 0, single buffered']
    %6 = vsyncpa [#allocation3], 0
    %7 = vsyncpa [#allocation4], 0
    // Predicated region
    $region2: #{tpu_custom_call.1} parent=1 // pred_check
      _
    $region3: #{tpu_custom_call.1} parent=1 // pred_check_branch
      %9 = sbr.rel (0) target = $region5
    $region4: #{tpu_custom_call.1} parent=1 // pred_region
      %s11 = ssub.s32 256, 256
      %12 = vsyncadd [#allocation3], %s11
      %s14 = sshll.u32 [#allocation2], 4
      %s15 = int_to_ptr.vmem [resolvable:$true] %s14
      %17 = dma.hbm_to_vmem [thread:$0]  %s0, 256, %s15, [#allocation3]
    $region5: #{tpu_custom_call.1} parent=1 // pred_fallthru
      _
    // Predicated region
    $region6: #{tpu_custom_call.1} parent=1 // pred_check
      _
    $region7: #{tpu_custom_call.1} parent=1 // pred_check_branch
      %19 = sbr.rel (0) target = $region9
    $region8: #{tpu_custom_call.1} parent=1 // pred_region
      %20 = dma.done [#allocation3], 256
    $region9: #{tpu_custom_call.1} parent=1 // pred_fallthru
      _
    %v21 = vld [vmem:[#allocation2] sm:$0xff]
    %v22 = vld [vmem:[#allocation2 + $0x8] sm:$0xff]
    %v23 = vadd.f32 %v21, 3.0
    %v24 = vadd.f32 %v22, 3.0
    %v25 = vmax.f32 %v23, 0.0
    %v26 = vmax.f32 %v24, 0.0
    %v27 = vmin.f32 %v25, 6.0
    %v28 = vmin.f32 %v26, 6.0
    %v29 = vmul.f32 %v27, 0.16666667
    %v30 = vmul.f32 %v28, 0.16666667
    %v31 = vmul.f32 %v21, %v29
    %v32 = vmul.f32 %v22, %v30
    %33 = vst [vmem:[#allocation5] sm:$0xff] %v31
    %34 = vst [vmem:[#allocation5 + $0x8] sm:$0xff] %v32
    // Predicated region
    $region10: #{tpu_custom_call.1} parent=1 // pred_check
      _
    $region11: #{tpu_custom_call.1} parent=1 // pred_check_branch
      %36 = sbr.rel (0) target = $region13
    $region12: #{tpu_custom_call.1} parent=1 // pred_region
      %s38 = ssub.s32 256, 256
      %39 = vsyncadd [#allocation4], %s38
      %s41 = sshll.u32 [#allocation5], 4
      %s42 = int_to_ptr.vmem [resolvable:$true] %s41
      %44 = dma.vmem_to_hbm [thread:$0]  %s42, 256, %s1, [#allocation4]
    $region13: #{tpu_custom_call.1} parent=1 // pred_fallthru
      _
    // Predicated region
    $region14: #{tpu_custom_call.1} parent=1 // pred_check
      _
    $region15: #{tpu_custom_call.1} parent=1 // pred_check_branch
      %46 = sbr.rel (0) target = $region17
    $region16: #{tpu_custom_call.1} parent=1 // pred_region
      %47 = dma.done [#allocation4], 256
    $region17: #{tpu_custom_call.1} parent=1 // pred_fallthru
      _
    %48 = vsyncpa [#allocation3], 1
    %49 = vsyncpa [#allocation4], 1

</llo_original>
